<compile_context>
chip_gen: v7x
topology: tpu7x:2x2x1
jax: 0.10.0
libtpu: 0.0.40
codegen_flags: <defaults>
</compile_context>

<pallas_src>
import functools

import jax
import jax.numpy as jnp
from jax.experimental import pallas as pl
from jax.experimental.pallas import tpu as pltpu


def _diff_kernel(x_ref, z_ref, wg_ref, wtail_ref, bias_ref, out_ref,
                 *, ni, zd, e, no):
    x = x_ref[...]
    z = z_ref[...]

    # Gate / value pre-activations: four independent lane-aligned MXU pushes.
    #   wg rows: [0:ni)           x -> gate
    #            [ni:ni+zd)       z -> gate
    #            [ni+zd:2ni+zd)   x -> value
    #            [2ni+zd:2(ni+zd)) z -> value
    gate_pre = (
        jnp.dot(x, wg_ref[0:ni, :], preferred_element_type=jnp.float32)
        + jnp.dot(z, wg_ref[ni:ni + zd, :], preferred_element_type=jnp.float32)
        + bias_ref[0:1, 0:e])
    val_pre = (
        jnp.dot(x, wg_ref[ni + zd:2 * ni + zd, :], preferred_element_type=jnp.float32)
        + jnp.dot(z, wg_ref[2 * ni + zd:2 * (ni + zd), :], preferred_element_type=jnp.float32)
        + bias_ref[1:2, 0:e])

    # sigmoid(x) == 0.5 * (tanh(x/2) + 1): single EUP push for the gate.
    gate = 0.5 * (jnp.tanh(0.5 * gate_pre) + 1.0)
    val = jnp.tanh(val_pre)
    h = gate * val

    # h = relu(linearall(h))   (wall = wtail rows [0:E))
    h = (jnp.dot(h, wtail_ref[0:e, 0:e], preferred_element_type=jnp.float32)
         + bias_ref[2:3, 0:e])
    h = jnp.maximum(h, 0.0)

    # out = last_fc(h)         (wlast = wtail rows [E:2E), cols [0:num_outputs))
    out = (jnp.dot(h, wtail_ref[e:2 * e, 0:no], preferred_element_type=jnp.float32)
           + bias_ref[3:4, 0:no])
    out_ref[...] = out.astype(out_ref.dtype)


def fuse_diff_params(p):
    """One-time algebraic fold + operand packing of the raw (torch-equivalent) params.

    conv(linear1(x)) = (x @ w1 + b1) @ wc + bc = x @ (w1 @ wc) + (b1 @ wc + bc),
    so both gated branches collapse into four bias-free dots on x and z.
    """
    ni = p["w1"].shape[0]
    zd = p["w1z"].shape[0]
    e = p["wall"].shape[0]
    no = p["wlast"].shape[1]

    w1f = p["w1"] @ p["wc"]                              # [ni, E]
    w2f = p["w2"] @ p["wc"]
    b_gate = p["b1"] @ p["wc"] + p["bc"] + p["b1z"]      # [1, E]
    b_val = p["b2"] @ p["wc"] + p["bc"] + p["b2z"]       # [1, E]

    # Row-blocked gate/value weights -> all in-kernel slices start at lane 0.
    wg = jnp.concatenate([w1f, p["w1z"], w2f, p["w2z"]], axis=0)   # [2(ni+zd), E]

    w = max(e, no)
    # One slab for the two tail weights (wall stacked over zero-padded wlast).
    wtail = jnp.zeros((2 * e, w), jnp.float32)
    wtail = wtail.at[:e, :e].set(p["wall"]).at[e:, :no].set(p["wlast"])

    # One slab for all four biases (one DMA instead of four).
    bias = jnp.zeros((4, w), jnp.float32)
    bias = (bias.at[0, :e].set(b_gate[0])
                .at[1, :e].set(b_val[0])
                .at[2, :e].set(p["ball"][0])
                .at[3, :no].set(p["blast"][0]))

    return {"wg": wg, "wtail": wtail, "bias": bias,
            "ni": ni, "zd": zd, "e": e, "no": no}


def diff_forward(x, z, fused):
    """x: [B, num_inputs], z: [B, z_dim] -> [B, num_outputs]."""
    B = x.shape[0]
    ni, zd, e, no = fused["ni"], fused["zd"], fused["e"], fused["no"]

    kernel = functools.partial(_diff_kernel, ni=ni, zd=zd, e=e, no=no)
    vmem = pl.BlockSpec(memory_space=pltpu.MemorySpace.VMEM)

    return pl.pallas_call(
        kernel,
        out_shape=jax.ShapeDtypeStruct((B, no), jnp.float32),
        in_specs=[vmem] * 5,
        out_specs=vmem,
    )(x, z, fused["wg"], fused["wtail"], fused["bias"])


def _xavier_uniform(key, fan_in, fan_out, dtype=jnp.float32):
    bound = (6.0 / (fan_in + fan_out)) ** 0.5
    # stored as [in, out] (transposed relative to torch's [out, in])
    return jax.random.uniform(key, (fan_in, fan_out), dtype, -bound, bound)


def init_diff_params(key, num_inputs, z_dim, embed_dim, num_outputs):
    ks = jax.random.split(key, 7)
    return {
        # nn.Linear weights: xavier_uniform, bias = 0 (weights_init_)
        "w1":    _xavier_uniform(ks[0], num_inputs, embed_dim),
        "b1":    jnp.zeros((1, embed_dim), jnp.float32),
        "w2":    _xavier_uniform(ks[1], num_inputs, embed_dim),
        "b2":    jnp.zeros((1, embed_dim), jnp.float32),
        "w1z":   _xavier_uniform(ks[2], z_dim, embed_dim),
        "b1z":   jnp.zeros((1, embed_dim), jnp.float32),
        "w2z":   _xavier_uniform(ks[3], z_dim, embed_dim),
        "b2z":   jnp.zeros((1, embed_dim), jnp.float32),
        # pointwise conv (kernel_size=1) == linear embed_dim -> embed_dim
        "wc":    _xavier_uniform(ks[4], embed_dim, embed_dim),
        "bc":    jnp.zeros((1, embed_dim), jnp.float32),
        "wall":  _xavier_uniform(ks[5], embed_dim, embed_dim),
        "ball":  jnp.zeros((1, embed_dim), jnp.float32),
        "wlast": _xavier_uniform(ks[6], embed_dim, num_outputs),
        "blast": jnp.zeros((1, num_outputs), jnp.float32),
    }


def diff_forward_ref(x, z, p):
    """Plain-JAX reference: the unfused, sequential layer chain."""
    a1 = x @ p["w1"] + p["b1"]
    c1 = a1 @ p["wc"] + p["bc"]
    g1 = z @ p["w1z"] + p["b1z"]
    a2 = x @ p["w2"] + p["b2"]
    c2 = a2 @ p["wc"] + p["bc"]
    g2 = z @ p["w2z"] + p["b2z"]
    h = jax.nn.sigmoid(c1 + g1) * jnp.tanh(c2 + g2)
    h = jnp.maximum(h @ p["wall"] + p["ball"], 0.0)
    return h @ p["wlast"] + p["blast"]


if __name__ == "__main__":
    B, NUM_INPUTS, Z_DIM, EMBED_DIM, NUM_OUTPUTS = 8, 16, 8, 32, 4

    key = jax.random.PRNGKey(0)
    kx, kz, kp, kb = jax.random.split(key, 4)
    x = jax.random.normal(kx, (B, NUM_INPUTS), jnp.float32)
    z = jax.random.normal(kz, (B, Z_DIM), jnp.float32)
    params = init_diff_params(kp, NUM_INPUTS, Z_DIM, EMBED_DIM, NUM_OUTPUTS)

    # Module init sets biases to zero; perturb them here so the bias-folding
    # path of fuse_diff_params is actually exercised by the correctness check.
    bkeys = jax.random.split(kb, 7)
    for i, name in enumerate(["b1", "b2", "b1z", "b2z", "bc", "ball", "blast"]):
        params[name] = 0.1 * jax.random.normal(bkeys[i], params[name].shape, jnp.float32)

    fused = fuse_diff_params(params)
    out = diff_forward(x, z, fused)
    out = jax.block_until_ready(out)

    ref = diff_forward_ref(x, z, params)
    assert out.shape == (B, NUM_OUTPUTS)
    assert jnp.allclose(out, ref, atol=5e-5, rtol=1e-5), float(jnp.max(jnp.abs(out - ref)))

    print("KERNEL_OK")
</pallas_src>

<mosaic_0001>
module attributes {stable_mosaic.version = 11 : i64} {
  func.func @_diff_kernel(%arg0: memref<8x16xf32, #tpu.memory_space<vmem>>, %arg1: memref<8x8xf32, #tpu.memory_space<vmem>>, %arg2: memref<48x32xf32, #tpu.memory_space<vmem>>, %arg3: memref<64x32xf32, #tpu.memory_space<vmem>>, %arg4: memref<4x32xf32, #tpu.memory_space<vmem>>, %arg5: memref<8x4xf32, #tpu.memory_space<vmem>>) attributes {dimension_semantics = [], scalar_prefetch = 0 : i64, scratch_operands = 0 : i64, tpu.core_type = #tpu.core_type<tc>} {
    %c0 = arith.constant 0 : index
    %c0_0 = arith.constant 0 : index
    %0 = vector.load %arg0[%c0, %c0_0] : memref<8x16xf32, #tpu.memory_space<vmem>>, vector<8x16xf32>
    %c0_1 = arith.constant 0 : index
    %c0_2 = arith.constant 0 : index
    %1 = vector.load %arg1[%c0_1, %c0_2] : memref<8x8xf32, #tpu.memory_space<vmem>>, vector<8x8xf32>
    %c0_3 = arith.constant 0 : index
    %c0_4 = arith.constant 0 : index
    %2 = vector.load %arg2[%c0_3, %c0_4] : memref<48x32xf32, #tpu.memory_space<vmem>>, vector<16x32xf32>
    %cst = arith.constant dense<0.000000e+00> : vector<8x32xf32>
    %3 = tpu.matmul %0, %2, %cst {dimension_numbers = #tpu.dot_dimension_numbers<[1], [0], [0], [1], [0, 0, 1, 1], [], []>} : vector<8x16xf32>, vector<16x32xf32>, vector<8x32xf32> -> vector<8x32xf32>
    %c16 = arith.constant 16 : index
    %c0_5 = arith.constant 0 : index
    %4 = vector.load %arg2[%c16, %c0_5] : memref<48x32xf32, #tpu.memory_space<vmem>>, vector<8x32xf32>
    %cst_6 = arith.constant dense<0.000000e+00> : vector<8x32xf32>
    %5 = tpu.matmul %1, %4, %cst_6 {dimension_numbers = #tpu.dot_dimension_numbers<[1], [0], [0], [1], [0, 0, 1, 1], [], []>} : vector<8x8xf32>, vector<8x32xf32>, vector<8x32xf32> -> vector<8x32xf32>
    %6 = arith.addf %3, %5 : vector<8x32xf32>
    %c0_7 = arith.constant 0 : index
    %c0_8 = arith.constant 0 : index
    %7 = vector.load %arg4[%c0_7, %c0_8] : memref<4x32xf32, #tpu.memory_space<vmem>>, vector<1x32xf32>
    %8 = vector.broadcast %7 : vector<1x32xf32> to vector<8x32xf32>
    %9 = arith.addf %6, %8 : vector<8x32xf32>
    %c24 = arith.constant 24 : index
    %c0_9 = arith.constant 0 : index
    %10 = vector.load %arg2[%c24, %c0_9] : memref<48x32xf32, #tpu.memory_space<vmem>>, vector<16x32xf32>
    %cst_10 = arith.constant dense<0.000000e+00> : vector<8x32xf32>
    %11 = tpu.matmul %0, %10, %cst_10 {dimension_numbers = #tpu.dot_dimension_numbers<[1], [0], [0], [1], [0, 0, 1, 1], [], []>} : vector<8x16xf32>, vector<16x32xf32>, vector<8x32xf32> -> vector<8x32xf32>
    %c40 = arith.constant 40 : index
    %c0_11 = arith.constant 0 : index
    %12 = vector.load %arg2[%c40, %c0_11] : memref<48x32xf32, #tpu.memory_space<vmem>>, vector<8x32xf32>
    %cst_12 = arith.constant dense<0.000000e+00> : vector<8x32xf32>
    %13 = tpu.matmul %1, %12, %cst_12 {dimension_numbers = #tpu.dot_dimension_numbers<[1], [0], [0], [1], [0, 0, 1, 1], [], []>} : vector<8x8xf32>, vector<8x32xf32>, vector<8x32xf32> -> vector<8x32xf32>
    %14 = arith.addf %11, %13 : vector<8x32xf32>
    %c1 = arith.constant 1 : index
    %c0_13 = arith.constant 0 : index
    %15 = vector.load %arg4[%c1, %c0_13] : memref<4x32xf32, #tpu.memory_space<vmem>>, vector<1x32xf32>
    %16 = vector.broadcast %15 : vector<1x32xf32> to vector<8x32xf32>
    %17 = arith.addf %14, %16 : vector<8x32xf32>
    %cst_14 = arith.constant 5.000000e-01 : f32
    %18 = vector.broadcast %cst_14 : f32 to vector<8x32xf32>
    %19 = arith.mulf %18, %9 : vector<8x32xf32>
    %20 = math.tanh %19 : vector<8x32xf32>
    %cst_15 = arith.constant 1.000000e+00 : f32
    %21 = vector.broadcast %cst_15 : f32 to vector<8x32xf32>
    %22 = arith.addf %20, %21 : vector<8x32xf32>
    %cst_16 = arith.constant 5.000000e-01 : f32
    %23 = vector.broadcast %cst_16 : f32 to vector<8x32xf32>
    %24 = arith.mulf %23, %22 : vector<8x32xf32>
    %25 = math.tanh %17 : vector<8x32xf32>
    %26 = arith.mulf %24, %25 : vector<8x32xf32>
    %c0_17 = arith.constant 0 : index
    %c0_18 = arith.constant 0 : index
    %27 = vector.load %arg3[%c0_17, %c0_18] : memref<64x32xf32, #tpu.memory_space<vmem>>, vector<32x32xf32>
    %cst_19 = arith.constant dense<0.000000e+00> : vector<8x32xf32>
    %28 = tpu.matmul %26, %27, %cst_19 {dimension_numbers = #tpu.dot_dimension_numbers<[1], [0], [0], [1], [0, 0, 1, 1], [], []>} : vector<8x32xf32>, vector<32x32xf32>, vector<8x32xf32> -> vector<8x32xf32>
    %c2 = arith.constant 2 : index
    %c0_20 = arith.constant 0 : index
    %29 = vector.load %arg4[%c2, %c0_20] : memref<4x32xf32, #tpu.memory_space<vmem>>, vector<1x32xf32>
    %30 = vector.broadcast %29 : vector<1x32xf32> to vector<8x32xf32>
    %31 = arith.addf %28, %30 : vector<8x32xf32>
    %cst_21 = arith.constant 0.000000e+00 : f32
    %32 = vector.broadcast %cst_21 : f32 to vector<8x32xf32>
    %33 = arith.maximumf %31, %32 : vector<8x32xf32>
    %c32 = arith.constant 32 : index
    %c0_22 = arith.constant 0 : index
    %34 = vector.load %arg3[%c32, %c0_22] : memref<64x32xf32, #tpu.memory_space<vmem>>, vector<32x4xf32>
    %cst_23 = arith.constant dense<0.000000e+00> : vector<8x4xf32>
    %35 = tpu.matmul %33, %34, %cst_23 {dimension_numbers = #tpu.dot_dimension_numbers<[1], [0], [0], [1], [0, 0, 1, 1], [], []>} : vector<8x32xf32>, vector<32x4xf32>, vector<8x4xf32> -> vector<8x4xf32>
    %c3 = arith.constant 3 : index
    %c0_24 = arith.constant 0 : index
    %36 = vector.load %arg4[%c3, %c0_24] : memref<4x32xf32, #tpu.memory_space<vmem>>, vector<1x4xf32>
    %37 = vector.broadcast %36 : vector<1x4xf32> to vector<8x4xf32>
    %38 = arith.addf %35, %37 : vector<8x4xf32>
    %c0_25 = arith.constant 0 : index
    %c0_26 = arith.constant 0 : index
    %39 = vector.load %arg5[%c0_25, %c0_26] : memref<8x4xf32, #tpu.memory_space<vmem>>, vector<8x4xf32>
    tpu.vector_store %arg5[%c0_25, %c0_26], %38 {strides = array<i32>} : memref<8x4xf32, #tpu.memory_space<vmem>>, vector<8x4xf32>,
    return
  }
}

</mosaic_0001>

<llo_original>
// kernel: tpu_custom_call.1
$region0: #{tpu_custom_call.1}
  #allocation0 [shape = 'u32[]', space=smem, size = 0x4, offset = 0x4, fixed_abs, tag = 'smem constant byte address 0x4 - core index']
  #allocation1 [shape = 'u32[144,128]{1,0:T(1,128)}', space=vmem, size = 0x12000, scoped, tag = 'internal scratch']
  %s0 = inlined_call_operand.vmem [shape: f32[8,16], index: 0, kind: input, shape index: {}]
  %s1 = inlined_call_operand.vmem [shape: f32[8,8], index: 1, kind: input, shape index: {}]
  %s2 = inlined_call_operand.vmem [shape: f32[48,32], index: 2, kind: input, shape index: {}]
  %s3 = inlined_call_operand.vmem [shape: f32[64,32], index: 3, kind: input, shape index: {}]
  %s4 = inlined_call_operand.vmem [shape: f32[4,32], index: 4, kind: input, shape index: {}]
  %s5 = inlined_call_operand.vmem [shape: f32[8,4], index: 5, kind: output, shape index: {}]
  %s6 = sld [smem:[#allocation0]]
  $region30: #{tpu_custom_call.1} parent=0
    _
  %s8 = ssub.s32 1, %s6
  %s9 = scalar_select 0, %s8, %s6
  // Predicated region
  $region2: #{tpu_custom_call.1} parent=0 // pred_check
    _
  $region3: #{tpu_custom_call.1} parent=0 // pred_check_branch
    %11 = sbr.rel (0) target = $region5
  $region4: #{tpu_custom_call.1} parent=0 // pred_region
    _
  $region5: #{tpu_custom_call.1} parent=0 // pred_fallthru
    _
  // Predicated region
  $region6: #{tpu_custom_call.1} parent=0 // pred_check
    _
  $region7: #{tpu_custom_call.1} parent=0 // pred_check_branch
    %13 = sbr.rel (0) target = $region9
  $region8: #{tpu_custom_call.1} parent=0 // pred_region
    _
  $region9: #{tpu_custom_call.1} parent=0 // pred_fallthru
    _
  // Predicated region
  $region10: #{tpu_custom_call.1} parent=0 // pred_check
    _
  $region11: #{tpu_custom_call.1} parent=0 // pred_check_branch
    %15 = sbr.rel (0) target = $region13
  $region12: #{tpu_custom_call.1} parent=0 // pred_region
    _
  $region13: #{tpu_custom_call.1} parent=0 // pred_fallthru
    _
  // Predicated region
  $region14: #{tpu_custom_call.1} parent=0 // pred_check
    _
  $region15: #{tpu_custom_call.1} parent=0 // pred_check_branch
    %17 = sbr.rel (0) target = $region17
  $region16: #{tpu_custom_call.1} parent=0 // pred_region
    _
  $region17: #{tpu_custom_call.1} parent=0 // pred_fallthru
    _
  // Predicated region
  $region18: #{tpu_custom_call.1} parent=0 // pred_check
    _
  $region19: #{tpu_custom_call.1} parent=0 // pred_check_branch
    %19 = sbr.rel (0) target = $region21
  $region20: #{tpu_custom_call.1} parent=0 // pred_region
    _
  $region21: #{tpu_custom_call.1} parent=0 // pred_fallthru
    _
  %v20 = vld [vmem:[%s0] sm:$0xff]
  %v21 = vld [vmem:[%s1] sm:$0xff]
  %v22 = vld [vmem:[%s2] sm:$0xff]
  %v23 = vld [vmem:[%s2 + $0x8] sm:$0xff]
  %v24 = vld [vmem:[%s2 + $0x10] sm:$0xff]
  %vm25 = vcmask 64512
  %v27 = vsel %vm25, %v21, 0
  %29 = vmatprep.subr.mxu0 0.0
  %30 = vmatpush1.msra.mxu0 %v24
  %31 = vmatprep.subr.mxu0 0.0
  %32 = vmatpush1.msra.mxu0 0.0
  %33 = vmatprep.subr.mxu0 0.0
  %34 = vmatpush1.msra.mxu0 0.0
  %35 = vmatprep.subr.mxu0 0.0
  %36 = vmatpush1.msra.mxu0 0.0
  %37 = vmatprep.subr.mxu0 0.0
  %38 = vmatpush1.msra.mxu0 0.0
  %39 = vmatprep.subr.mxu0 0.0
  %40 = vmatpush1.msra.mxu0 0.0
  %41 = vmatprep.subr.mxu0 0.0
  %42 = vmatpush1.msra.mxu0 0.0
  %43 = vmatprep.subr.mxu0 0.0
  %44 = vmatpush1.msra.mxu0 0.0
  %45 = vmatprep.subr.mxu0 0.0
  %46 = vmatpush1.msra.mxu0 0.0
  %47 = vmatprep.subr.mxu0 0.0
  %48 = vmatpush1.msra.mxu0 0.0
  %49 = vmatprep.subr.mxu0 0.0
  %50 = vmatpush1.msra.mxu0 0.0
  %51 = vmatprep.subr.mxu0 0.0
  %52 = vmatpush1.msra.mxu0 0.0
  %53 = vmatprep.subr.mxu0 0.0
  %54 = vmatpush1.msra.mxu0 0.0
  %55 = vmatprep.subr.mxu0 0.0
  %56 = vmatpush1.msra.mxu0 0.0
  %57 = vmatprep.subr.mxu0 0.0
  %58 = vmatpush1.msra.mxu0 0.0
  %59 = vmatprep.subr.mxu0 0.0
  %60 = vmatpush1.msra.mxu0 0.0
  %61 = vmatprep.subr.mxu0 0.0
  %62 = vmatpush1.msra.mxu0 0.0
  %63 = vmatprep.subr.mxu0 0.0
  %64 = vmatpush1.msra.mxu0 0.0
  %65 = vmatprep.subr.mxu0 0.0
  %66 = vmatpush1.msra.mxu0 0.0
  %67 = vmatprep.subr.mxu0 0.0
  %68 = vmatpush1.msra.mxu0 0.0
  %69 = vmatprep.subr.mxu0 0.0
  %70 = vmatpush1.msra.mxu0 0.0
  %71 = vmatprep.subr.mxu0 0.0
  %72 = vmatpush1.msra.mxu0 0.0
  %73 = vmatprep.subr.mxu0 0.0
  %74 = vmatpush1.msra.mxu0 0.0
  %75 = vmatprep.subr.mxu0 0.0
  %76 = vmatpush1.msra.mxu0 0.0
  %77 = vmatprep.subr.mxu0 0.0
  %78 = vmatpush1.msra.mxu0 0.0
  %79 = vmatprep.subr.mxu0 0.0
  %80 = vmatpush1.msra.mxu0 0.0
  %81 = vmatprep.subr.mxu0 0.0
  %82 = vmatpush1.msra.mxu0 0.0
  %83 = vmatprep.subr.mxu0 0.0
  %84 = vmatpush1.msra.mxu0 0.0
  %85 = vmatprep.subr.mxu0 0.0
  %86 = vmatpush1.msra.mxu0 0.0
  %87 = vmatprep.subr.mxu0 0.0
  %88 = vmatpush1.msra.mxu0 0.0
  %89 = vmatprep.subr.mxu0 0.0
  %90 = vmatpush1.msra.mxu0 0.0
  %91 = vmatprep.subr.mxu0 0.0
  %92 = vmatpush1.msra.mxu0 0.0
  %93 = vmatprep.mubr.f32.mxu0 0.0
  %94 = vmatmul.mubr.f32.gmra.mrb[0].mxu0 %v27
  %v95 = vpop.f32.mrb[0].mxu0
  %v96 = vadd.f32 0.0, %v95
  %v97 = vpop.f32.mrb[0].mxu0
  %98 = vdwg.mxu0
  %vm99 = vcmask 130048
  %v101 = vsel %vm99, %v20, 0
  %103 = vmatprep.subr.mxu0 0.0
  %104 = vmatpush1.msra.mxu0 %v22
  %105 = vmatprep.subr.mxu0 0.0
  %106 = vmatpush1.msra.mxu0 %v23
  %107 = vmatprep.subr.mxu0 0.0
  %108 = vmatpush1.msra.mxu0 0.0
  %109 = vmatprep.subr.mxu0 0.0
  %110 = vmatpush1.msra.mxu0 0.0
  %111 = vmatprep.subr.mxu0 0.0
  %112 = vmatpush1.msra.mxu0 0.0
  %113 = vmatprep.subr.mxu0 0.0
  %114 = vmatpush1.msra.mxu0 0.0
  %115 = vmatprep.subr.mxu0 0.0
  %116 = vmatpush1.msra.mxu0 0.0
  %117 = vmatprep.subr.mxu0 0.0
  %118 = vmatpush1.msra.mxu0 0.0
  %119 = vmatprep.subr.mxu0 0.0
  %120 = vmatpush1.msra.mxu0 0.0
  %121 = vmatprep.subr.mxu0 0.0
  %122 = vmatpush1.msra.mxu0 0.0
  %123 = vmatprep.subr.mxu0 0.0
  %124 = vmatpush1.msra.mxu0 0.0
  %125 = vmatprep.subr.mxu0 0.0
  %126 = vmatpush1.msra.mxu0 0.0
  %127 = vmatprep.subr.mxu0 0.0
  %128 = vmatpush1.msra.mxu0 0.0
  %129 = vmatprep.subr.mxu0 0.0
  %130 = vmatpush1.msra.mxu0 0.0
  %131 = vmatprep.subr.mxu0 0.0
  %132 = vmatpush1.msra.mxu0 0.0
  %133 = vmatprep.subr.mxu0 0.0
  %134 = vmatpush1.msra.mxu0 0.0
  %135 = vmatprep.subr.mxu0 0.0
  %136 = vmatpush1.msra.mxu0 0.0
  %137 = vmatprep.subr.mxu0 0.0
  %138 = vmatpush1.msra.mxu0 0.0
  %139 = vmatprep.subr.mxu0 0.0
  %140 = vmatpush1.msra.mxu0 0.0
  %141 = vmatprep.subr.mxu0 0.0
  %142 = vmatpush1.msra.mxu0 0.0
  %143 = vmatprep.subr.mxu0 0.0
  %144 = vmatpush1.msra.mxu0 0.0
  %145 = vmatprep.subr.mxu0 0.0
  %146 = vmatpush1.msra.mxu0 0.0
  %147 = vmatprep.subr.mxu0 0.0
  %148 = vmatpush1.msra.mxu0 0.0
  %149 = vmatprep.subr.mxu0 0.0
  %150 = vmatpush1.msra.mxu0 0.0
  %151 = vmatprep.subr.mxu0 0.0
  %152 = vmatpush1.msra.mxu0 0.0
  %153 = vmatprep.subr.mxu0 0.0
  %154 = vmatpush1.msra.mxu0 0.0
  %155 = vmatprep.subr.mxu0 0.0
  %156 = vmatpush1.msra.mxu0 0.0
  %157 = vmatprep.subr.mxu0 0.0
  %158 = vmatpush1.msra.mxu0 0.0
  %159 = vmatprep.subr.mxu0 0.0
  %160 = vmatpush1.msra.mxu0 0.0
  %161 = vmatprep.subr.mxu0 0.0
  %162 = vmatpush1.msra.mxu0 0.0
  %163 = vmatprep.subr.mxu0 0.0
  %164 = vmatpush1.msra.mxu0 0.0
  %165 = vmatprep.subr.mxu0 0.0
  %166 = vmatpush1.msra.mxu0 0.0
  %167 = vmatprep.mubr.f32.mxu0 0.0
  %168 = vmatmul.mubr.f32.gmra.mrb[0].mxu0 %v101
  %v169 = vpop.f32.mrb[0].mxu0
  %v170 = vadd.f32 %v96, %v169
  %v171 = vpop.f32.mrb[0].mxu0
  %172 = vdwg.mxu0
  %v173 = vld [vmem:[%s4] sm:$0x1]
  %v174 = vlaneseq
  %v175 = vshrl.u32 %v174, 7
  %v176 = vsub.s32 0, %v175
  %v177 = vrot.slane %v173, %v176
  %v178 = vadd.f32 %v170, %v177
  %v179 = vld [vmem:[%s2 + $0x18] sm:$0xff]
  %v180 = vld [vmem:[%s2 + $0x20] sm:$0xff]
  %v181 = vld [vmem:[%s2 + $0x28] sm:$0xff]
  %182 = vmatprep.subr.mxu0 0.0
  %183 = vmatpush1.msra.mxu0 %v181
  %184 = vmatprep.subr.mxu0 0.0
  %185 = vmatpush1.msra.mxu0 0.0
  %186 = vmatprep.subr.mxu0 0.0
  %187 = vmatpush1.msra.mxu0 0.0
  %188 = vmatprep.subr.mxu0 0.0
  %189 = vmatpush1.msra.mxu0 0.0
  %190 = vmatprep.subr.mxu0 0.0
  %191 = vmatpush1.msra.mxu0 0.0
  %192 = vmatprep.subr.mxu0 0.0
  %193 = vmatpush1.msra.mxu0 0.0
  %194 = vmatprep.subr.mxu0 0.0
  %195 = vmatpush1.msra.mxu0 0.0
  %196 = vmatprep.subr.mxu0 0.0
  %197 = vmatpush1.msra.mxu0 0.0
  %198 = vmatprep.subr.mxu0 0.0
  %199 = vmatpush1.msra.mxu0 0.0
  %200 = vmatprep.subr.mxu0 0.0
  %201 = vmatpush1.msra.mxu0 0.0
  %202 = vmatprep.subr.mxu0 0.0
  %203 = vmatpush1.msra.mxu0 0.0
  %204 = vmatprep.subr.mxu0 0.0
  %205 = vmatpush1.msra.mxu0 0.0
  %206 = vmatprep.subr.mxu0 0.0
  %207 = vmatpush1.msra.mxu0 0.0
  %208 = vmatprep.subr.mxu0 0.0
  %209 = vmatpush1.msra.mxu0 0.0
  %210 = vmatprep.subr.mxu0 0.0
  %211 = vmatpush1.msra.mxu0 0.0
  %212 = vmatprep.subr.mxu0 0.0
  %213 = vmatpush1.msra.mxu0 0.0
  %214 = vmatprep.subr.mxu0 0.0
  %215 = vmatpush1.msra.mxu0 0.0
  %216 = vmatprep.subr.mxu0 0.0
  %217 = vmatpush1.msra.mxu0 0.0
  %218 = vmatprep.subr.mxu0 0.0
  %219 = vmatpush1.msra.mxu0 0.0
  %220 = vmatprep.subr.mxu0 0.0
  %221 = vmatpush1.msra.mxu0 0.0
  %222 = vmatprep.subr.mxu0 0.0
  %223 = vmatpush1.msra.mxu0 0.0
  %224 = vmatprep.subr.mxu0 0.0
  %225 = vmatpush1.msra.mxu0 0.0
  %226 = vmatprep.subr.mxu0 0.0
  %227 = vmatpush1.msra.mxu0 0.0
  %228 = vmatprep.subr.mxu0 0.0
  %229 = vmatpush1.msra.mxu0 0.0
  %230 = vmatprep.subr.mxu0 0.0
  %231 = vmatpush1.msra.mxu0 0.0
  %232 = vmatprep.subr.mxu0 0.0
  %233 = vmatpush1.msra.mxu0 0.0
  %234 = vmatprep.subr.mxu0 0.0
  %235 = vmatpush1.msra.mxu0 0.0
  %236 = vmatprep.subr.mxu0 0.0
  %237 = vmatpush1.msra.mxu0 0.0
  %238 = vmatprep.subr.mxu0 0.0
  %239 = vmatpush1.msra.mxu0 0.0
  %240 = vmatprep.subr.mxu0 0.0
  %241 = vmatpush1.msra.mxu0 0.0
  %242 = vmatprep.subr.mxu0 0.0
  %243 = vmatpush1.msra.mxu0 0.0
  %244 = vmatprep.subr.mxu0 0.0
  %245 = vmatpush1.msra.mxu0 0.0
  %246 = vmatprep.mubr.f32.mxu0 0.0
  %247 = vmatmul.mubr.f32.gmra.mrb[0].mxu0 %v27
  %v248 = vpop.f32.mrb[0].mxu0
  %v249 = vadd.f32 0.0, %v248
  %v250 = vpop.f32.mrb[0].mxu0
  %251 = vdwg.mxu0
  %252 = vmatprep.subr.mxu0 0.0
  %253 = vmatpush1.msra.mxu0 %v179
  %254 = vmatprep.subr.mxu0 0.0
  %255 = vmatpush1.msra.mxu0 %v180
  %256 = vmatprep.subr.mxu0 0.0
  %257 = vmatpush1.msra.mxu0 0.0
  %258 = vmatprep.subr.mxu0 0.0
  %259 = vmatpush1.msra.mxu0 0.0
  %260 = vmatprep.subr.mxu0 0.0
  %261 = vmatpush1.msra.mxu0 0.0
  %262 = vmatprep.subr.mxu0 0.0
  %263 = vmatpush1.msra.mxu0 0.0
  %264 = vmatprep.subr.mxu0 0.0
  %265 = vmatpush1.msra.mxu0 0.0
  %266 = vmatprep.subr.mxu0 0.0
  %267 = vmatpush1.msra.mxu0 0.0
  %268 = vmatprep.subr.mxu0 0.0
  %269 = vmatpush1.msra.mxu0 0.0
  %270 = vmatprep.subr.mxu0 0.0
  %271 = vmatpush1.msra.mxu0 0.0
  %272 = vmatprep.subr.mxu0 0.0
  %273 = vmatpush1.msra.mxu0 0.0
  %274 = vmatprep.subr.mxu0 0.0
  %275 = vmatpush1.msra.mxu0 0.0
  %276 = vmatprep.subr.mxu0 0.0
  %277 = vmatpush1.msra.mxu0 0.0
  %278 = vmatprep.subr.mxu0 0.0
  %279 = vmatpush1.msra.mxu0 0.0
  %280 = vmatprep.subr.mxu0 0.0
  %281 = vmatpush1.msra.mxu0 0.0
  %282 = vmatprep.subr.mxu0 0.0
  %283 = vmatpush1.msra.mxu0 0.0
  %284 = vmatprep.subr.mxu0 0.0
  %285 = vmatpush1.msra.mxu0 0.0
  %286 = vmatprep.subr.mxu0 0.0
  %287 = vmatpush1.msra.mxu0 0.0
  %288 = vmatprep.subr.mxu0 0.0
  %289 = vmatpush1.msra.mxu0 0.0
  %290 = vmatprep.subr.mxu0 0.0
  %291 = vmatpush1.msra.mxu0 0.0
  %292 = vmatprep.subr.mxu0 0.0
  %293 = vmatpush1.msra.mxu0 0.0
  %294 = vmatprep.subr.mxu0 0.0
  %295 = vmatpush1.msra.mxu0 0.0
  %296 = vmatprep.subr.mxu0 0.0
  %297 = vmatpush1.msra.mxu0 0.0
  %298 = vmatprep.subr.mxu0 0.0
  %299 = vmatpush1.msra.mxu0 0.0
  %300 = vmatprep.subr.mxu0 0.0
  %301 = vmatpush1.msra.mxu0 0.0
  %302 = vmatprep.subr.mxu0 0.0
  %303 = vmatpush1.msra.mxu0 0.0
  %304 = vmatprep.subr.mxu0 0.0
  %305 = vmatpush1.msra.mxu0 0.0
  %306 = vmatprep.subr.mxu0 0.0
  %307 = vmatpush1.msra.mxu0 0.0
  %308 = vmatprep.subr.mxu0 0.0
  %309 = vmatpush1.msra.mxu0 0.0
  %310 = vmatprep.subr.mxu0 0.0
  %311 = vmatpush1.msra.mxu0 0.0
  %312 = vmatprep.subr.mxu0 0.0
  %313 = vmatpush1.msra.mxu0 0.0
  %314 = vmatprep.subr.mxu0 0.0
  %315 = vmatpush1.msra.mxu0 0.0
  %316 = vmatprep.mubr.f32.mxu0 0.0
  %317 = vmatmul.mubr.f32.gmra.mrb[0].mxu0 %v101
  %v318 = vpop.f32.mrb[0].mxu0
  %v319 = vadd.f32 %v249, %v318
  %v320 = vpop.f32.mrb[0].mxu0
  %321 = vdwg.mxu0
  %v322 = vld [vmem:[%s4 + $0x1] sm:$0x1]
  %v323 = vlaneseq
  %v324 = vshrl.u32 %v323, 7
  %v325 = vsub.s32 0, %v324
  %v326 = vrot.slane %v322, %v325
  %v327 = vadd.f32 %v319, %v326
  %v328 = vmul.f32 %v178, 0.5
  %v329 = vtanh.pop %v328
  %v330 = vadd.f32 %v329, 1.0
  %v331 = vmul.f32 %v330, 0.5
  %v332 = vtanh.pop %v327
  %v333 = vmul.f32 %v331, %v332
  %v334 = vld [vmem:[%s3] sm:$0xff]
  %v335 = vld [vmem:[%s3 + $0x8] sm:$0xff]
  %v336 = vld [vmem:[%s3 + $0x10] sm:$0xff]
  %v337 = vld [vmem:[%s3 + $0x18] sm:$0xff]
  %v338 = vld [vmem:[%s4 + $0x2] sm:$0x1]
  %v339 = vlaneseq
  %v340 = vshrl.u32 %v339, 7
  %v341 = vsub.s32 0, %v340
  %v342 = vrot.slane %v338, %v341
  %vm343 = vcmask 261120
  %v345 = vsel %vm343, %v333, 0
  %347 = vmatprep.subr.mxu0 0.0
  %348 = vmatpush1.msra.mxu0 %v334
  %349 = vmatprep.subr.mxu0 0.0
  %350 = vmatpush1.msra.mxu0 %v335
  %351 = vmatprep.subr.mxu0 0.0
  %352 = vmatpush1.msra.mxu0 %v336
  %353 = vmatprep.subr.mxu0 0.0
  %354 = vmatpush1.msra.mxu0 %v337
  %355 = vmatprep.subr.mxu0 0.0
  %356 = vmatpush1.msra.mxu0 0.0
  %357 = vmatprep.subr.mxu0 0.0
  %358 = vmatpush1.msra.mxu0 0.0
  %359 = vmatprep.subr.mxu0 0.0
  %360 = vmatpush1.msra.mxu0 0.0
  %361 = vmatprep.subr.mxu0 0.0
  %362 = vmatpush1.msra.mxu0 0.0
  %363 = vmatprep.subr.mxu0 0.0
  %364 = vmatpush1.msra.mxu0 0.0
  %365 = vmatprep.subr.mxu0 0.0
  %366 = vmatpush1.msra.mxu0 0.0
  %367 = vmatprep.subr.mxu0 0.0
  %368 = vmatpush1.msra.mxu0 0.0
  %369 = vmatprep.subr.mxu0 0.0
  %370 = vmatpush1.msra.mxu0 0.0
  %371 = vmatprep.subr.mxu0 0.0
  %372 = vmatpush1.msra.mxu0 0.0
  %373 = vmatprep.subr.mxu0 0.0
  %374 = vmatpush1.msra.mxu0 0.0
  %375 = vmatprep.subr.mxu0 0.0
  %376 = vmatpush1.msra.mxu0 0.0
  %377 = vmatprep.subr.mxu0 0.0
  %378 = vmatpush1.msra.mxu0 0.0
  %379 = vmatprep.subr.mxu0 0.0
  %380 = vmatpush1.msra.mxu0 0.0
  %381 = vmatprep.subr.mxu0 0.0
  %382 = vmatpush1.msra.mxu0 0.0
  %383 = vmatprep.subr.mxu0 0.0
  %384 = vmatpush1.msra.mxu0 0.0
  %385 = vmatprep.subr.mxu0 0.0
  %386 = vmatpush1.msra.mxu0 0.0
  %387 = vmatprep.subr.mxu0 0.0
  %388 = vmatpush1.msra.mxu0 0.0
  %389 = vmatprep.subr.mxu0 0.0
  %390 = vmatpush1.msra.mxu0 0.0
  %391 = vmatprep.subr.mxu0 0.0
  %392 = vmatpush1.msra.mxu0 0.0
  %393 = vmatprep.subr.mxu0 0.0
  %394 = vmatpush1.msra.mxu0 0.0
  %395 = vmatprep.subr.mxu0 0.0
  %396 = vmatpush1.msra.mxu0 0.0
  %397 = vmatprep.subr.mxu0 0.0
  %398 = vmatpush1.msra.mxu0 0.0
  %399 = vmatprep.subr.mxu0 0.0
  %400 = vmatpush1.msra.mxu0 0.0
  %401 = vmatprep.subr.mxu0 0.0
  %402 = vmatpush1.msra.mxu0 0.0
  %403 = vmatprep.subr.mxu0 0.0
  %404 = vmatpush1.msra.mxu0 0.0
  %405 = vmatprep.subr.mxu0 0.0
  %406 = vmatpush1.msra.mxu0 0.0
  %407 = vmatprep.subr.mxu0 0.0
  %408 = vmatpush1.msra.mxu0 0.0
  %409 = vmatprep.subr.mxu0 0.0
  %410 = vmatpush1.msra.mxu0 0.0
  %411 = vmatprep.mubr.f32.mxu0 0.0
  %412 = vmatmul.mubr.f32.gmra.mrb[0].mxu0 %v345
  %v413 = vpop.f32.mrb[0].mxu0
  %v414 = vadd.f32 %v342, %v413
  %v415 = vpop.f32.mrb[0].mxu0
  %416 = vdwg.mxu0
  %v417 = vmax.f32 %v414, 0.0
  %v418 = vld [vmem:[%s3 + $0x20] sm:$0xff]
  %v419 = vld [vmem:[%s3 + $0x28] sm:$0xff]
  %v420 = vld [vmem:[%s3 + $0x30] sm:$0xff]
  %v421 = vld [vmem:[%s3 + $0x38] sm:$0xff]
  %v422 = vld [vmem:[%s4 + $0x3] sm:$0x1]
  %v423 = vlaneseq
  %v424 = vshrl.u32 %v423, 7
  %v425 = vsub.s32 0, %v424
  %v426 = vrot.slane %v422, %v425
  %v428 = vsel %vm343, %v417, 0
  %430 = vmatprep.subr.mxu0 0.0
  %431 = vmatpush1.msra.mxu0 %v418
  %432 = vmatprep.subr.mxu0 0.0
  %433 = vmatpush1.msra.mxu0 %v419
  %434 = vmatprep.subr.mxu0 0.0
  %435 = vmatpush1.msra.mxu0 %v420
  %436 = vmatprep.subr.mxu0 0.0
  %437 = vmatpush1.msra.mxu0 %v421
  %438 = vmatprep.subr.mxu0 0.0
  %439 = vmatpush1.msra.mxu0 0.0
  %440 = vmatprep.subr.mxu0 0.0
  %441 = vmatpush1.msra.mxu0 0.0
  %442 = vmatprep.subr.mxu0 0.0
  %443 = vmatpush1.msra.mxu0 0.0
  %444 = vmatprep.subr.mxu0 0.0
  %445 = vmatpush1.msra.mxu0 0.0
  %446 = vmatprep.subr.mxu0 0.0
  %447 = vmatpush1.msra.mxu0 0.0
  %448 = vmatprep.subr.mxu0 0.0
  %449 = vmatpush1.msra.mxu0 0.0
  %450 = vmatprep.subr.mxu0 0.0
  %451 = vmatpush1.msra.mxu0 0.0
  %452 = vmatprep.subr.mxu0 0.0
  %453 = vmatpush1.msra.mxu0 0.0
  %454 = vmatprep.subr.mxu0 0.0
  %455 = vmatpush1.msra.mxu0 0.0
  %456 = vmatprep.subr.mxu0 0.0
  %457 = vmatpush1.msra.mxu0 0.0
  %458 = vmatprep.subr.mxu0 0.0
  %459 = vmatpush1.msra.mxu0 0.0
  %460 = vmatprep.subr.mxu0 0.0
  %461 = vmatpush1.msra.mxu0 0.0
  %462 = vmatprep.subr.mxu0 0.0
  %463 = vmatpush1.msra.mxu0 0.0
  %464 = vmatprep.subr.mxu0 0.0
  %465 = vmatpush1.msra.mxu0 0.0
  %466 = vmatprep.subr.mxu0 0.0
  %467 = vmatpush1.msra.mxu0 0.0
  %468 = vmatprep.subr.mxu0 0.0
  %469 = vmatpush1.msra.mxu0 0.0
  %470 = vmatprep.subr.mxu0 0.0
  %471 = vmatpush1.msra.mxu0 0.0
  %472 = vmatprep.subr.mxu0 0.0
  %473 = vmatpush1.msra.mxu0 0.0
  %474 = vmatprep.subr.mxu0 0.0
  %475 = vmatpush1.msra.mxu0 0.0
  %476 = vmatprep.subr.mxu0 0.0
  %477 = vmatpush1.msra.mxu0 0.0
  %478 = vmatprep.subr.mxu0 0.0
  %479 = vmatpush1.msra.mxu0 0.0
  %480 = vmatprep.subr.mxu0 0.0
  %481 = vmatpush1.msra.mxu0 0.0
  %482 = vmatprep.subr.mxu0 0.0
  %483 = vmatpush1.msra.mxu0 0.0
  %484 = vmatprep.subr.mxu0 0.0
  %485 = vmatpush1.msra.mxu0 0.0
  %486 = vmatprep.subr.mxu0 0.0
  %487 = vmatpush1.msra.mxu0 0.0
  %488 = vmatprep.subr.mxu0 0.0
  %489 = vmatpush1.msra.mxu0 0.0
  %490 = vmatprep.subr.mxu0 0.0
  %491 = vmatpush1.msra.mxu0 0.0
  %492 = vmatprep.subr.mxu0 0.0
  %493 = vmatpush1.msra.mxu0 0.0
  %494 = vmatprep.mubr.f32.mxu0 0.0
  %495 = vmatmul.mubr.f32.gmra.mrb[0].mxu0 %v428
  %v496 = vpop.f32.mrb[0].mxu0
  %v497 = vadd.f32 %v426, %v496
  %v498 = vpop.f32.mrb[0].mxu0
  %499 = vdwg.mxu0
  %vm500 = vcmask 31744
  %501 = vst.msk [vmem:[%s5] sm:$0xff] %vm500, %v497
  // Predicated region
  $region22: #{tpu_custom_call.1} parent=0 // pred_check
    _
  $region23: #{tpu_custom_call.1} parent=0 // pred_check_branch
    %503 = sbr.rel (0) target = $region25
  $region24: #{tpu_custom_call.1} parent=0 // pred_region
    _
  $region25: #{tpu_custom_call.1} parent=0 // pred_fallthru
    _
  // Predicated region
  $region26: #{tpu_custom_call.1} parent=0 // pred_check
    _
  $region27: #{tpu_custom_call.1} parent=0 // pred_check_branch
    %505 = sbr.rel (0) target = $region29
  $region28: #{tpu_custom_call.1} parent=0 // pred_region
    _
  $region29: #{tpu_custom_call.1} parent=0 // pred_fallthru
    _

</llo_original>
